<compile_context>
chip_gen: v7x
topology: tpu7x:2x2x1
jax: 0.10.0
libtpu: 0.0.40
codegen_flags: <defaults>
</compile_context>

<pallas_src>
import functools

import jax
import jax.numpy as jnp
from jax.experimental import pallas as pl
from jax.experimental.pallas import tpu as pltpu

NEG_SLOPE = 0.01            # F.leaky_relu default negative_slope
SUBLANE = 8                 # batch tiling granularity
NUM_LAYERS = 5
DEFAULT_BATCH_TILE = 4096   # rows per grid step for large batches
MIN_SPLIT_ROWS = 256        # if B >= 2*this, use >=2 grid steps (v7x megacore)
VMEM_LIMIT_BYTES = 32 * 1024 * 1024


def _round_up(n, m):
    return ((n + m - 1) // m) * m


def _geometry(obs_dims, n_actions):
    """Padding geometry for the fused block-diagonal packing."""
    input_dims = obs_dims + n_actions
    h1 = int(input_dims * 2)
    h2 = int(input_dims * 2)
    # per-head lane offset of the reward head inside the 128-wide slab
    half = _round_up(max(h1, h2, 1), SUBLANE)
    # lane-dense slab width (weights' last dim, activation width between layers)
    slab = max(128, _round_up(half + h2, 128))
    assert h1 <= half and half + h2 <= slab, "heads do not fit in the slab"
    assert obs_dims + 1 <= slab, "final outputs do not fit in the slab"
    return input_dims, h1, h2, half, slab


# --------------------------------------------------------------------------- #
# Kernel                                                                      #
# --------------------------------------------------------------------------- #
def _env_mlp_kernel(x_ref, w0_ref, w_ref, b_ref, o_ref):
    """Fused two-head MLP chain (one batch tile).

    x_ref : (tile, input_dims)      raw input rows (no padding materialized)
    w0_ref: (input_dims, slab)      fused layer-0 weight (both heads)
    w_ref : (L-1, slab, slab)       fused block-diagonal weights, layers 1..4
    b_ref : (L, 1, slab)            fused biases
    o_ref : (tile, slab)            final output slab
                                    (next_state lanes [0:obs), reward lane obs)
    """
    h = jnp.dot(x_ref[...], w0_ref[...], preferred_element_type=jnp.float32) + b_ref[0]
    h = jnp.maximum(h, NEG_SLOPE * h)                 # leaky_relu, 2 VALU ops
    for i in range(NUM_LAYERS - 2):                   # hidden layers 1..3
        y = jnp.dot(h, w_ref[i], preferred_element_type=jnp.float32) + b_ref[i + 1]
        h = jnp.maximum(y, NEG_SLOPE * y)
    o_ref[...] = (
        jnp.dot(h, w_ref[NUM_LAYERS - 2], preferred_element_type=jnp.float32)
        + b_ref[NUM_LAYERS - 1]
    )


# --------------------------------------------------------------------------- #
# One-time parameter packing (hoisted out of the hot path)                    #
# --------------------------------------------------------------------------- #
def pack_params(ns_params, rw_params, obs_dims, n_actions=1):
    """Pack per-layer (W, b) of both heads into fused block-diagonal stacks.

    ns_params / rw_params: lists of 5 (W, b) with W in (in, out) layout.
    Returns:
      w0      : (input_dims, slab) f32   layer-0 fused weight
      w_rest  : (L-1, slab, slab)  f32   layers 1..4 fused weights
      b_packed: (L, 1, slab)       f32   fused biases
    """
    _, _, _, half, slab = _geometry(obs_dims, n_actions)
    assert len(ns_params) == len(rw_params) == NUM_LAYERS

    input_dims = ns_params[0][0].shape[0]
    w0 = jnp.zeros((input_dims, slab), jnp.float32)
    w_rest = jnp.zeros((NUM_LAYERS - 1, slab, slab), jnp.float32)
    b = jnp.zeros((NUM_LAYERS, 1, slab), jnp.float32)

    # Layer 0: both heads read the raw input rows.
    (wn, bn), (wr, br) = ns_params[0], rw_params[0]
    w0 = w0.at[: wn.shape[0], : wn.shape[1]].set(wn.astype(jnp.float32))
    w0 = w0.at[: wr.shape[0], half : half + wr.shape[1]].set(wr.astype(jnp.float32))
    b = b.at[0, 0, : bn.shape[0]].set(bn.astype(jnp.float32))
    b = b.at[0, 0, half : half + br.shape[0]].set(br.astype(jnp.float32))

    # Hidden layers 1..3: block-diagonal.
    for i in range(1, NUM_LAYERS - 1):
        (wn, bn), (wr, br) = ns_params[i], rw_params[i]
        w_rest = w_rest.at[i - 1, : wn.shape[0], : wn.shape[1]].set(
            wn.astype(jnp.float32))
        w_rest = w_rest.at[
            i - 1, half : half + wr.shape[0], half : half + wr.shape[1]
        ].set(wr.astype(jnp.float32))
        b = b.at[i, 0, : bn.shape[0]].set(bn.astype(jnp.float32))
        b = b.at[i, 0, half : half + br.shape[0]].set(br.astype(jnp.float32))

    # Final layer: next_state in lanes [0:obs_dims), reward at lane obs_dims
    # (adjacent -> one contiguous output slice in the wrapper).
    (wn, bn), (wr, br) = ns_params[-1], rw_params[-1]
    w_rest = w_rest.at[-1, : wn.shape[0], : wn.shape[1]].set(wn.astype(jnp.float32))
    w_rest = w_rest.at[
        -1, half : half + wr.shape[0], obs_dims : obs_dims + wr.shape[1]
    ].set(wr.astype(jnp.float32))
    b = b.at[-1, 0, : bn.shape[0]].set(bn.astype(jnp.float32))
    b = b.at[-1, 0, obs_dims : obs_dims + br.shape[0]].set(br.astype(jnp.float32))
    return w0, w_rest, b


# --------------------------------------------------------------------------- #
# Forward factory (jitted; weight prep already done)                          #
# --------------------------------------------------------------------------- #
def make_forward(obs_dims, n_actions=1, batch_tile=DEFAULT_BATCH_TILE):
    input_dims, _, _, _, slab = _geometry(obs_dims, n_actions)
    batch_tile = max(_round_up(batch_tile, SUBLANE), SUBLANE)

    @jax.jit
    def forward(x, w0, w_rest, b_packed):
        x = jnp.asarray(x, jnp.float32)
        assert x.ndim == 2 and x.shape[1] == input_dims
        B = x.shape[0]

        # Static (trace-time) tile choice:
        #  - huge batches: fixed batch_tile
        #  - medium batches: split into 2 grid steps (v7x: one per TensorCore)
        #  - small batches: single (possibly partial) block, no padding pass
        if B > batch_tile:
            tile = batch_tile
        elif B >= 2 * MIN_SPLIT_ROWS:
            tile = _round_up(pl.cdiv(B, 2), SUBLANE)
        else:
            tile = max(_round_up(B, SUBLANE), SUBLANE)
        grid_n = pl.cdiv(B, tile)

        out = pl.pallas_call(
            _env_mlp_kernel,
            out_shape=jax.ShapeDtypeStruct((B, slab), jnp.float32),
            grid=(grid_n,),
            in_specs=[
                pl.BlockSpec((tile, input_dims), lambda i: (i, 0)),
                # Constant index_map -> weights stay VMEM-resident across steps.
                pl.BlockSpec((input_dims, slab), lambda i: (0, 0)),
                pl.BlockSpec((NUM_LAYERS - 1, slab, slab), lambda i: (0, 0, 0)),
                pl.BlockSpec((NUM_LAYERS, 1, slab), lambda i: (0, 0, 0)),
            ],
            out_specs=pl.BlockSpec((tile, slab), lambda i: (i, 0)),
            compiler_params=pltpu.CompilerParams(
                dimension_semantics=("parallel",),
                vmem_limit_bytes=VMEM_LIMIT_BYTES,
            ),
        )(x, w0, w_rest, b_packed)

        head = out[:, : obs_dims + 1]                 # one contiguous slice
        pred_next_state = head[:, :obs_dims]
        pred_reward = head[:, obs_dims : obs_dims + 1]
        return pred_next_state, pred_reward

    return forward


# --------------------------------------------------------------------------- #
# Parameter init (mimics nn.Linear default U(-1/sqrt(fan_in), 1/sqrt(fan_in)))#
# --------------------------------------------------------------------------- #
def init_params(key, obs_dims, n_actions=1):
    input_dims = obs_dims + n_actions
    h1 = int(input_dims * 2)
    h2 = int(input_dims * 2)

    def linear(key, fan_in, fan_out):
        kw, kb = jax.random.split(key)
        bound = 1.0 / jnp.sqrt(float(fan_in))
        w = jax.random.uniform(kw, (fan_in, fan_out), jnp.float32, -bound, bound)
        b = jax.random.uniform(kb, (fan_out,), jnp.float32, -bound, bound)
        return w, b

    dims_ns = [(input_dims, h1), (h1, h1), (h1, h1), (h1, h1), (h1, obs_dims)]
    dims_rw = [(input_dims, h2), (h2, h2), (h2, h2), (h2, h2), (h2, 1)]

    keys = jax.random.split(key, 10)
    ns_params = [linear(keys[i], *dims_ns[i]) for i in range(5)]
    rw_params = [linear(keys[5 + i], *dims_rw[i]) for i in range(5)]
    return ns_params, rw_params


def _leaky_relu(x):
    return jnp.where(x > 0, x, NEG_SLOPE * x)


def _reference_forward(x, ns_params, rw_params):
    """Plain-JAX reference matching Environment_Module.forward."""
    def head(x, params):
        h = x
        for i, (w, b) in enumerate(params):
            h = h @ w + b
            if i < len(params) - 1:
                h = _leaky_relu(h)
        return h
    return head(x, ns_params), head(x, rw_params)


# --------------------------------------------------------------------------- #
if __name__ == "__main__":
    obs_dims, n_actions = 7, 1
    input_dims = obs_dims + n_actions

    key = jax.random.PRNGKey(0)
    k_params, k_x, k_x2 = jax.random.split(key, 3)
    ns_params, rw_params = init_params(k_params, obs_dims, n_actions)

    # One-time packing (hoisted out of the hot path).
    w0, w_rest, b_packed = pack_params(ns_params, rw_params, obs_dims, n_actions)

    forward = make_forward(obs_dims, n_actions)

    # --- small batch: single (partial) block path ---
    batch = 4
    x = jax.random.normal(k_x, (batch, input_dims), jnp.float32)
    pred_ns, pred_rw = forward(x, w0, w_rest, b_packed)
    jax.block_until_ready((pred_ns, pred_rw))

    ref_ns, ref_rw = _reference_forward(x, ns_params, rw_params)
    assert pred_ns.shape == (batch, obs_dims)
    assert pred_rw.shape == (batch, 1)
    assert jnp.allclose(pred_ns, ref_ns, atol=1e-4, rtol=1e-4)
    assert jnp.allclose(pred_rw, ref_rw, atol=1e-4, rtol=1e-4)

    # --- medium batch: 2-step "parallel" grid (v7x both TCs), partial last block ---
    mid_batch = 600
    x_mid = jax.random.normal(k_x2, (mid_batch, input_dims), jnp.float32)
    ns_mid, rw_mid = forward(x_mid, w0, w_rest, b_packed)
    jax.block_until_ready((ns_mid, rw_mid))

    ref_ns_m, ref_rw_m = _reference_forward(x_mid, ns_params, rw_params)
    assert ns_mid.shape == (mid_batch, obs_dims)
    assert rw_mid.shape == (mid_batch, 1)
    assert jnp.allclose(ns_mid, ref_ns_m, atol=1e-4, rtol=1e-4)
    assert jnp.allclose(rw_mid, ref_rw_m, atol=1e-4, rtol=1e-4)

    # --- many-step grid with a small tile (exercise the pipelined path) ---
    forward_tiled = make_forward(obs_dims, n_actions, batch_tile=128)
    ns_t, rw_t = forward_tiled(x_mid, w0, w_rest, b_packed)
    jax.block_until_ready((ns_t, rw_t))
    assert jnp.allclose(ns_t, ref_ns_m, atol=1e-4, rtol=1e-4)
    assert jnp.allclose(rw_t, ref_rw_m, atol=1e-4, rtol=1e-4)

    print("KERNEL_OK")
</pallas_src>

<mosaic_0001>
module attributes {stable_mosaic.version = 11 : i64} {
  func.func @_env_mlp_kernel(%arg0: i32, %arg1: memref<8x8xf32, #tpu.memory_space<vmem>>, %arg2: memref<8x128xf32, #tpu.memory_space<vmem>>, %arg3: memref<4x128x128xf32, #tpu.memory_space<vmem>>, %arg4: memref<5x1x128xf32, #tpu.memory_space<vmem>>, %arg5: memref<8x128xf32, #tpu.memory_space<vmem>>) attributes {dimension_semantics = [#tpu.dimension_semantics<parallel>], iteration_bounds = array<i64: 1>, scalar_prefetch = 0 : i64, scratch_operands = 0 : i64, tpu.core_type = #tpu.core_type<tc>, window_params = [{transform_indices = @transform_0, window_bounds = array<i64: 8, 8>}, {pipeline_mode = #tpu.pipeline_mode<synchronous>, transform_indices = @transform_1, window_bounds = array<i64: 8, 128>}, {pipeline_mode = #tpu.pipeline_mode<synchronous>, transform_indices = @transform_2, window_bounds = array<i64: 4, 128, 128>}, {pipeline_mode = #tpu.pipeline_mode<synchronous>, transform_indices = @transform_3, window_bounds = array<i64: 5, 1, 128>}, {transform_indices = @transform_4, window_bounds = array<i64: 8, 128>}]} {
    %c0 = arith.constant 0 : index
    %c0_0 = arith.constant 0 : index
    %0 = vector.load %arg1[%c0, %c0_0] : memref<8x8xf32, #tpu.memory_space<vmem>>, vector<8x8xf32>
    %c0_1 = arith.constant 0 : index
    %c0_2 = arith.constant 0 : index
    %1 = vector.load %arg2[%c0_1, %c0_2] : memref<8x128xf32, #tpu.memory_space<vmem>>, vector<8x128xf32>
    %cst = arith.constant dense<0.000000e+00> : vector<8x128xf32>
    %2 = tpu.matmul %0, %1, %cst {dimension_numbers = #tpu.dot_dimension_numbers<[1], [0], [0], [1], [0, 0, 1, 1], [], []>} : vector<8x8xf32>, vector<8x128xf32>, vector<8x128xf32> -> vector<8x128xf32>
    %c0_3 = arith.constant 0 : index
    %c0_4 = arith.constant 0 : index
    %c0_5 = arith.constant 0 : index
    %3 = vector.load %arg4[%c0_3, %c0_4, %c0_5] : memref<5x1x128xf32, #tpu.memory_space<vmem>>, vector<1x1x128xf32>
    %4 = vector.shape_cast %3 : vector<1x1x128xf32> to vector<1x128xf32>
    %5 = vector.broadcast %4 : vector<1x128xf32> to vector<8x128xf32>
    %6 = arith.addf %2, %5 : vector<8x128xf32>
    %cst_6 = arith.constant 0.00999999977 : f32
    %7 = vector.broadcast %cst_6 : f32 to vector<8x128xf32>
    %8 = arith.mulf %7, %6 : vector<8x128xf32>
    %9 = arith.maximumf %6, %8 : vector<8x128xf32>
    %c0_7 = arith.constant 0 : index
    %c0_8 = arith.constant 0 : index
    %c0_9 = arith.constant 0 : index
    %10 = vector.load %arg3[%c0_7, %c0_8, %c0_9] : memref<4x128x128xf32, #tpu.memory_space<vmem>>, vector<1x128x128xf32>
    %11 = vector.shape_cast %10 : vector<1x128x128xf32> to vector<128x128xf32>
    %cst_10 = arith.constant dense<0.000000e+00> : vector<8x128xf32>
    %12 = tpu.matmul %9, %11, %cst_10 {dimension_numbers = #tpu.dot_dimension_numbers<[1], [0], [0], [1], [0, 0, 1, 1], [], []>} : vector<8x128xf32>, vector<128x128xf32>, vector<8x128xf32> -> vector<8x128xf32>
    %c1 = arith.constant 1 : index
    %c0_11 = arith.constant 0 : index
    %c0_12 = arith.constant 0 : index
    %13 = vector.load %arg4[%c1, %c0_11, %c0_12] : memref<5x1x128xf32, #tpu.memory_space<vmem>>, vector<1x1x128xf32>
    %14 = vector.shape_cast %13 : vector<1x1x128xf32> to vector<1x128xf32>
    %15 = vector.broadcast %14 : vector<1x128xf32> to vector<8x128xf32>
    %16 = arith.addf %12, %15 : vector<8x128xf32>
    %cst_13 = arith.constant 0.00999999977 : f32
    %17 = vector.broadcast %cst_13 : f32 to vector<8x128xf32>
    %18 = arith.mulf %17, %16 : vector<8x128xf32>
    %19 = arith.maximumf %16, %18 : vector<8x128xf32>
    %c1_14 = arith.constant 1 : index
    %c0_15 = arith.constant 0 : index
    %c0_16 = arith.constant 0 : index
    %20 = vector.load %arg3[%c1_14, %c0_15, %c0_16] : memref<4x128x128xf32, #tpu.memory_space<vmem>>, vector<1x128x128xf32>
    %21 = vector.shape_cast %20 : vector<1x128x128xf32> to vector<128x128xf32>
    %cst_17 = arith.constant dense<0.000000e+00> : vector<8x128xf32>
    %22 = tpu.matmul %19, %21, %cst_17 {dimension_numbers = #tpu.dot_dimension_numbers<[1], [0], [0], [1], [0, 0, 1, 1], [], []>} : vector<8x128xf32>, vector<128x128xf32>, vector<8x128xf32> -> vector<8x128xf32>
    %c2 = arith.constant 2 : index
    %c0_18 = arith.constant 0 : index
    %c0_19 = arith.constant 0 : index
    %23 = vector.load %arg4[%c2, %c0_18, %c0_19] : memref<5x1x128xf32, #tpu.memory_space<vmem>>, vector<1x1x128xf32>
    %24 = vector.shape_cast %23 : vector<1x1x128xf32> to vector<1x128xf32>
    %25 = vector.broadcast %24 : vector<1x128xf32> to vector<8x128xf32>
    %26 = arith.addf %22, %25 : vector<8x128xf32>
    %cst_20 = arith.constant 0.00999999977 : f32
    %27 = vector.broadcast %cst_20 : f32 to vector<8x128xf32>
    %28 = arith.mulf %27, %26 : vector<8x128xf32>
    %29 = arith.maximumf %26, %28 : vector<8x128xf32>
    %c2_21 = arith.constant 2 : index
    %c0_22 = arith.constant 0 : index
    %c0_23 = arith.constant 0 : index
    %30 = vector.load %arg3[%c2_21, %c0_22, %c0_23] : memref<4x128x128xf32, #tpu.memory_space<vmem>>, vector<1x128x128xf32>
    %31 = vector.shape_cast %30 : vector<1x128x128xf32> to vector<128x128xf32>
    %cst_24 = arith.constant dense<0.000000e+00> : vector<8x128xf32>
    %32 = tpu.matmul %29, %31, %cst_24 {dimension_numbers = #tpu.dot_dimension_numbers<[1], [0], [0], [1], [0, 0, 1, 1], [], []>} : vector<8x128xf32>, vector<128x128xf32>, vector<8x128xf32> -> vector<8x128xf32>
    %c3 = arith.constant 3 : index
    %c0_25 = arith.constant 0 : index
    %c0_26 = arith.constant 0 : index
    %33 = vector.load %arg4[%c3, %c0_25, %c0_26] : memref<5x1x128xf32, #tpu.memory_space<vmem>>, vector<1x1x128xf32>
    %34 = vector.shape_cast %33 : vector<1x1x128xf32> to vector<1x128xf32>
    %35 = vector.broadcast %34 : vector<1x128xf32> to vector<8x128xf32>
    %36 = arith.addf %32, %35 : vector<8x128xf32>
    %cst_27 = arith.constant 0.00999999977 : f32
    %37 = vector.broadcast %cst_27 : f32 to vector<8x128xf32>
    %38 = arith.mulf %37, %36 : vector<8x128xf32>
    %39 = arith.maximumf %36, %38 : vector<8x128xf32>
    %c3_28 = arith.constant 3 : index
    %c0_29 = arith.constant 0 : index
    %c0_30 = arith.constant 0 : index
    %40 = vector.load %arg3[%c3_28, %c0_29, %c0_30] : memref<4x128x128xf32, #tpu.memory_space<vmem>>, vector<1x128x128xf32>
    %41 = vector.shape_cast %40 : vector<1x128x128xf32> to vector<128x128xf32>
    %cst_31 = arith.constant dense<0.000000e+00> : vector<8x128xf32>
    %42 = tpu.matmul %39, %41, %cst_31 {dimension_numbers = #tpu.dot_dimension_numbers<[1], [0], [0], [1], [0, 0, 1, 1], [], []>} : vector<8x128xf32>, vector<128x128xf32>, vector<8x128xf32> -> vector<8x128xf32>
    %c4 = arith.constant 4 : index
    %c0_32 = arith.constant 0 : index
    %c0_33 = arith.constant 0 : index
    %43 = vector.load %arg4[%c4, %c0_32, %c0_33] : memref<5x1x128xf32, #tpu.memory_space<vmem>>, vector<1x1x128xf32>
    %44 = vector.shape_cast %43 : vector<1x1x128xf32> to vector<1x128xf32>
    %45 = vector.broadcast %44 : vector<1x128xf32> to vector<8x128xf32>
    %46 = arith.addf %42, %45 : vector<8x128xf32>
    %c0_34 = arith.constant 0 : index
    %c0_35 = arith.constant 0 : index
    %47 = vector.load %arg5[%c0_34, %c0_35] : memref<8x128xf32, #tpu.memory_space<vmem>>, vector<8x128xf32>
    tpu.vector_store %arg5[%c0_34, %c0_35], %46 {strides = array<i32>} : memref<8x128xf32, #tpu.memory_space<vmem>>, vector<8x128xf32>,
    return
  }
  func.func @transform_0(%arg0: i32) -> (i32, i32) {
    %c0_i32 = arith.constant 0 : i32
    %c0_i32_0 = arith.constant 0 : i32
    return %arg0, %c0_i32 : i32, i32
  }
  func.func @transform_1(%arg0: i32) -> (i32, i32) {
    %c0_i32 = arith.constant 0 : i32
    %c0_i32_0 = arith.constant 0 : i32
    %c0_i32_1 = arith.constant 0 : i32
    return %c0_i32, %c0_i32_0 : i32, i32
  }
  func.func @transform_2(%arg0: i32) -> (i32, i32, i32) {
    %c0_i32 = arith.constant 0 : i32
    %c0_i32_0 = arith.constant 0 : i32
    %c0_i32_1 = arith.constant 0 : i32
    %c0_i32_2 = arith.constant 0 : i32
    return %c0_i32, %c0_i32_0, %c0_i32_1 : i32, i32, i32
  }
  func.func @transform_3(%arg0: i32) -> (i32, i32, i32) {
    %c0_i32 = arith.constant 0 : i32
    %c0_i32_0 = arith.constant 0 : i32
    %c0_i32_1 = arith.constant 0 : i32
    %c0_i32_2 = arith.constant 0 : i32
    return %c0_i32, %c0_i32_0, %c0_i32_1 : i32, i32, i32
  }
  func.func @transform_4(%arg0: i32) -> (i32, i32) {
    %c0_i32 = arith.constant 0 : i32
    %c0_i32_0 = arith.constant 0 : i32
    return %arg0, %c0_i32 : i32, i32
  }
}

</mosaic_0001>

<llo_original>
// kernel: forward.1
$region0: #{forward.1}
  #allocation0 [shape = 'u32[]', space=smem, size = 0x4, offset = 0x4, fixed_abs, tag = 'smem constant byte address 0x4 - core index']
  #allocation1 [shape = 'u32[144,128]{1,0:T(1,128)}', space=vmem, size = 0x12000, scoped, tag = 'internal scratch']
  %s0 = inlined_call_operand.hbm [shape: f32[4,8], index: 0, kind: input, shape index: {}]
  %s1 = inlined_call_operand.hbm [shape: f32[8,128], index: 1, kind: input, shape index: {}]
  %s2 = inlined_call_operand.hbm [shape: f32[4,128,128], index: 2, kind: input, shape index: {}]
  %s3 = inlined_call_operand.vmem [shape: f32[5,1,128], index: 3, kind: input, shape index: {}]
  %s4 = inlined_call_operand.vmem [shape: f32[4,128], index: 4, kind: output, shape index: {}]
  %s5 = sld [smem:[#allocation0]]
  $region68: #{forward.1} parent=0
    _
  %s7 = ssub.s32 1, %s5
  %s8 = scalar_select 0, %s7, %s5
  $region1: #{forward.1} parent=0
    #allocation2 [shape = 'u8[4096]{0}', space=vmem, size = 0x1000, scoped, tag = 'input window, operand 0, single buffered']
    #allocation3 [shape = 's32[1]{0}', space=sflag, size = 0x4, scoped, tag = 'scoped memory for forward.1']
    #allocation4 [shape = 'u8[4096]{0}', space=vmem, size = 0x1000, scoped, tag = 'input window, operand 1, single buffered']
    #allocation5 [shape = 's32[1]{0}', space=sflag, size = 0x4, scoped, tag = 'scoped memory for forward.1']
    #allocation6 [shape = 'u8[262144]{0}', space=vmem, size = 0x40000, scoped, tag = 'input window, operand 2, single buffered']
    #allocation7 [shape = 'u8[4096]{0}', space=vmem, size = 0x1000, scoped, tag = 'output window, operand 0, single buffered']
    %9 = vsyncpa [#allocation3], 0
    %10 = vsyncpa [#allocation5], 0
    // Predicated region
    $region2: #{forward.1} parent=1 // pred_check
      _
    $region3: #{forward.1} parent=1 // pred_check_branch
      %12 = sbr.rel (0) target = $region5
    $region4: #{forward.1} parent=1 // pred_region
      %s14 = ssub.s32 128, 64
      %15 = vsyncadd [#allocation3], %s14
      %s16 = sshll.u32 [#allocation2], 4
      %s17 = int_to_ptr.vmem [resolvable:$true] %s16
      %22 = dma.hbm_to_vmem [thread:$0]  %s0, 64, %s17, [#allocation3], 64, 64, 4
    $region5: #{forward.1} parent=1 // pred_fallthru
      _
    // Predicated region
    $region6: #{forward.1} parent=1 // pred_check
      _
    $region7: #{forward.1} parent=1 // pred_check_branch
      %24 = sbr.rel (0) target = $region9
    $region8: #{forward.1} parent=1 // pred_region
      %s26 = ssub.s32 128, 128
      %27 = vsyncadd [#allocation5], %s26
      %s29 = sshll.u32 [#allocation4], 4
      %s30 = int_to_ptr.vmem [resolvable:$true] %s29
      %32 = dma.hbm_to_vmem [thread:$0]  %s1, 128, %s30, [#allocation5]
    $region9: #{forward.1} parent=1 // pred_fallthru
      _
    // Predicated region
    $region10: #{forward.1} parent=1 // pred_check
      _
    $region11: #{forward.1} parent=1 // pred_check_branch
      %34 = sbr.rel (0) target = $region13
    $region12: #{forward.1} parent=1 // pred_region
      %s36 = ssub.s32 8192, 8192
      %37 = vsyncadd [#allocation5], %s36
      %s38 = sshll.u32 [#allocation6], 4
      %s39 = int_to_ptr.vmem [resolvable:$true] %s38
      %44 = dma.hbm_to_vmem [thread:$0]  %s2, 8192, %s39, [#allocation5], 128, 128, 8
    $region13: #{forward.1} parent=1 // pred_fallthru
      _
    // Predicated region
    $region14: #{forward.1} parent=1 // pred_check
      _
    $region15: #{forward.1} parent=1 // pred_check_branch
      %46 = sbr.rel (0) target = $region17
    $region16: #{forward.1} parent=1 // pred_region
      _
    $region17: #{forward.1} parent=1 // pred_fallthru
      _
    // Predicated region
    $region18: #{forward.1} parent=1 // pred_check
      _
    $region19: #{forward.1} parent=1 // pred_check_branch
      %48 = sbr.rel (0) target = $region21
    $region20: #{forward.1} parent=1 // pred_region
      %49 = dma.done [#allocation3], 128
    $region21: #{forward.1} parent=1 // pred_fallthru
      _
    // Predicated region
    $region22: #{forward.1} parent=1 // pred_check
      _
    $region23: #{forward.1} parent=1 // pred_check_branch
      %51 = sbr.rel (0) target = $region25
    $region24: #{forward.1} parent=1 // pred_region
      %52 = dma.done [#allocation5], 128
    $region25: #{forward.1} parent=1 // pred_fallthru
      _
    // Predicated region
    $region26: #{forward.1} parent=1 // pred_check
      _
    $region27: #{forward.1} parent=1 // pred_check_branch
      %54 = sbr.rel (0) target = $region29
    $region28: #{forward.1} parent=1 // pred_region
      %55 = dma.done [#allocation5], 8192
    $region29: #{forward.1} parent=1 // pred_fallthru
      _
    %v56 = vld [vmem:[#allocation2] sm:$0xff]
    %v57 = vld [vmem:[#allocation4] sm:$0xff]
    %v58 = vld [vmem:[%s3] sm:$0x1]
    %v60 = vlaneseq
    %v61 = vshrl.u32 %v60, 7
    %v62 = vsub.s32 0, %v61
    %v63 = vrot.slane %v58, %v62
    %vm65 = vcmask 64512
    %v67 = vsel %vm65, %v56, 0
    %69 = vmatprep.subr.mxu0 0.0
    %70 = vmatpush1.msra.mxu0 %v57
    %71 = vmatprep.subr.mxu0 0.0
    %72 = vmatpush1.msra.mxu0 0.0
    %73 = vmatprep.subr.mxu0 0.0
    %74 = vmatpush1.msra.mxu0 0.0
    %75 = vmatprep.subr.mxu0 0.0
    %76 = vmatpush1.msra.mxu0 0.0
    %77 = vmatprep.subr.mxu0 0.0
    %78 = vmatpush1.msra.mxu0 0.0
    %79 = vmatprep.subr.mxu0 0.0
    %80 = vmatpush1.msra.mxu0 0.0
    %81 = vmatprep.subr.mxu0 0.0
    %82 = vmatpush1.msra.mxu0 0.0
    %83 = vmatprep.subr.mxu0 0.0
    %84 = vmatpush1.msra.mxu0 0.0
    %85 = vmatprep.subr.mxu0 0.0
    %86 = vmatpush1.msra.mxu0 0.0
    %87 = vmatprep.subr.mxu0 0.0
    %88 = vmatpush1.msra.mxu0 0.0
    %89 = vmatprep.subr.mxu0 0.0
    %90 = vmatpush1.msra.mxu0 0.0
    %91 = vmatprep.subr.mxu0 0.0
    %92 = vmatpush1.msra.mxu0 0.0
    %93 = vmatprep.subr.mxu0 0.0
    %94 = vmatpush1.msra.mxu0 0.0
    %95 = vmatprep.subr.mxu0 0.0
    %96 = vmatpush1.msra.mxu0 0.0
    %97 = vmatprep.subr.mxu0 0.0
    %98 = vmatpush1.msra.mxu0 0.0
    %99 = vmatprep.subr.mxu0 0.0
    %100 = vmatpush1.msra.mxu0 0.0
    %101 = vmatprep.subr.mxu0 0.0
    %102 = vmatpush1.msra.mxu0 0.0
    %103 = vmatprep.subr.mxu0 0.0
    %104 = vmatpush1.msra.mxu0 0.0
    %105 = vmatprep.subr.mxu0 0.0
    %106 = vmatpush1.msra.mxu0 0.0
    %107 = vmatprep.subr.mxu0 0.0
    %108 = vmatpush1.msra.mxu0 0.0
    %109 = vmatprep.subr.mxu0 0.0
    %110 = vmatpush1.msra.mxu0 0.0
    %111 = vmatprep.subr.mxu0 0.0
    %112 = vmatpush1.msra.mxu0 0.0
    %113 = vmatprep.subr.mxu0 0.0
    %114 = vmatpush1.msra.mxu0 0.0
    %115 = vmatprep.subr.mxu0 0.0
    %116 = vmatpush1.msra.mxu0 0.0
    %117 = vmatprep.subr.mxu0 0.0
    %118 = vmatpush1.msra.mxu0 0.0
    %119 = vmatprep.subr.mxu0 0.0
    %120 = vmatpush1.msra.mxu0 0.0
    %121 = vmatprep.subr.mxu0 0.0
    %122 = vmatpush1.msra.mxu0 0.0
    %123 = vmatprep.subr.mxu0 0.0
    %124 = vmatpush1.msra.mxu0 0.0
    %125 = vmatprep.subr.mxu0 0.0
    %126 = vmatpush1.msra.mxu0 0.0
    %127 = vmatprep.subr.mxu0 0.0
    %128 = vmatpush1.msra.mxu0 0.0
    %129 = vmatprep.subr.mxu0 0.0
    %130 = vmatpush1.msra.mxu0 0.0
    %131 = vmatprep.subr.mxu0 0.0
    %132 = vmatpush1.msra.mxu0 0.0
    %133 = vmatprep.mubr.f32.mxu0 0.0
    %134 = vmatmul.mubr.f32.gmra.mrb[0].mxu0 %v67
    %v135 = vpop.f32.mrb[0].mxu0
    %v136 = vadd.f32 %v63, %v135
    %v137 = vpop.f32.mrb[0].mxu0
    %138 = vdwg.mxu0
    %v139 = vmul.f32 %v136, 0.01
    %v140 = vmax.f32 %v136, %v139
    %v141 = vld [vmem:[#allocation6] sm:$0xff]
    %v142 = vld [vmem:[#allocation6 + $0x8] sm:$0xff]
    %v143 = vld [vmem:[#allocation6 + $0x10] sm:$0xff]
    %v144 = vld [vmem:[#allocation6 + $0x18] sm:$0xff]
    %v145 = vld [vmem:[#allocation6 + $0x20] sm:$0xff]
    %v146 = vld [vmem:[#allocation6 + $0x28] sm:$0xff]
    %v147 = vld [vmem:[#allocation6 + $0x30] sm:$0xff]
    %v148 = vld [vmem:[#allocation6 + $0x38] sm:$0xff]
    %v149 = vld [vmem:[#allocation6 + $0x40] sm:$0xff]
    %v150 = vld [vmem:[#allocation6 + $0x48] sm:$0xff]
    %v151 = vld [vmem:[#allocation6 + $0x50] sm:$0xff]
    %v152 = vld [vmem:[#allocation6 + $0x58] sm:$0xff]
    %v153 = vld [vmem:[#allocation6 + $0x60] sm:$0xff]
    %v154 = vld [vmem:[#allocation6 + $0x68] sm:$0xff]
    %v155 = vld [vmem:[#allocation6 + $0x70] sm:$0xff]
    %v156 = vld [vmem:[#allocation6 + $0x78] sm:$0xff]
    %s157 = scalar_lea.vmem %s3, 1
    %v158 = vld [vmem:[%s157] sm:$0x1]
    %v160 = vlaneseq
    %v161 = vshrl.u32 %v160, 7
    %v162 = vsub.s32 0, %v161
    %v163 = vrot.slane %v158, %v162
    %165 = vmatprep.subr.mxu0 0.0
    %166 = vmatpush1.msra.mxu0 %v141
    %167 = vmatprep.subr.mxu0 0.0
    %168 = vmatpush1.msra.mxu0 %v142
    %169 = vmatprep.subr.mxu0 0.0
    %170 = vmatpush1.msra.mxu0 %v143
    %171 = vmatprep.subr.mxu0 0.0
    %172 = vmatpush1.msra.mxu0 %v144
    %173 = vmatprep.subr.mxu0 0.0
    %174 = vmatpush1.msra.mxu0 %v145
    %175 = vmatprep.subr.mxu0 0.0
    %176 = vmatpush1.msra.mxu0 %v146
    %177 = vmatprep.subr.mxu0 0.0
    %178 = vmatpush1.msra.mxu0 %v147
    %179 = vmatprep.subr.mxu0 0.0
    %180 = vmatpush1.msra.mxu0 %v148
    %181 = vmatprep.subr.mxu0 0.0
    %182 = vmatpush1.msra.mxu0 %v149
    %183 = vmatprep.subr.mxu0 0.0
    %184 = vmatpush1.msra.mxu0 %v150
    %185 = vmatprep.subr.mxu0 0.0
    %186 = vmatpush1.msra.mxu0 %v151
    %187 = vmatprep.subr.mxu0 0.0
    %188 = vmatpush1.msra.mxu0 %v152
    %189 = vmatprep.subr.mxu0 0.0
    %190 = vmatpush1.msra.mxu0 %v153
    %191 = vmatprep.subr.mxu0 0.0
    %192 = vmatpush1.msra.mxu0 %v154
    %193 = vmatprep.subr.mxu0 0.0
    %194 = vmatpush1.msra.mxu0 %v155
    %195 = vmatprep.subr.mxu0 0.0
    %196 = vmatpush1.msra.mxu0 %v156
    %197 = vmatprep.subr.mxu0 0.0
    %198 = vmatpush1.msra.mxu0 0.0
    %199 = vmatprep.subr.mxu0 0.0
    %200 = vmatpush1.msra.mxu0 0.0
    %201 = vmatprep.subr.mxu0 0.0
    %202 = vmatpush1.msra.mxu0 0.0
    %203 = vmatprep.subr.mxu0 0.0
    %204 = vmatpush1.msra.mxu0 0.0
    %205 = vmatprep.subr.mxu0 0.0
    %206 = vmatpush1.msra.mxu0 0.0
    %207 = vmatprep.subr.mxu0 0.0
    %208 = vmatpush1.msra.mxu0 0.0
    %209 = vmatprep.subr.mxu0 0.0
    %210 = vmatpush1.msra.mxu0 0.0
    %211 = vmatprep.subr.mxu0 0.0
    %212 = vmatpush1.msra.mxu0 0.0
    %213 = vmatprep.subr.mxu0 0.0
    %214 = vmatpush1.msra.mxu0 0.0
    %215 = vmatprep.subr.mxu0 0.0
    %216 = vmatpush1.msra.mxu0 0.0
    %217 = vmatprep.subr.mxu0 0.0
    %218 = vmatpush1.msra.mxu0 0.0
    %219 = vmatprep.subr.mxu0 0.0
    %220 = vmatpush1.msra.mxu0 0.0
    %221 = vmatprep.subr.mxu0 0.0
    %222 = vmatpush1.msra.mxu0 0.0
    %223 = vmatprep.subr.mxu0 0.0
    %224 = vmatpush1.msra.mxu0 0.0
    %225 = vmatprep.subr.mxu0 0.0
    %226 = vmatpush1.msra.mxu0 0.0
    %227 = vmatprep.subr.mxu0 0.0
    %228 = vmatpush1.msra.mxu0 0.0
    %229 = vmatprep.mubr.f32.mxu0 0.0
    %230 = vmatmul.mubr.f32.gmra.mrb[0].mxu0 %v140
    %v231 = vpop.f32.mrb[0].mxu0
    %v232 = vadd.f32 %v163, %v231
    %v233 = vpop.f32.mrb[0].mxu0
    %234 = vdwg.mxu0
    %v235 = vmul.f32 %v232, 0.01
    %v236 = vmax.f32 %v232, %v235
    %s237 = scalar_lea.vmem [#allocation6], 128
    %v238 = vld [vmem:[%s237] sm:$0xff]
    %v239 = vld [vmem:[%s237 + $0x8] sm:$0xff]
    %v240 = vld [vmem:[%s237 + $0x10] sm:$0xff]
    %v241 = vld [vmem:[%s237 + $0x18] sm:$0xff]
    %v242 = vld [vmem:[%s237 + $0x20] sm:$0xff]
    %v243 = vld [vmem:[%s237 + $0x28] sm:$0xff]
    %v244 = vld [vmem:[%s237 + $0x30] sm:$0xff]
    %v245 = vld [vmem:[%s237 + $0x38] sm:$0xff]
    %v246 = vld [vmem:[%s237 + $0x40] sm:$0xff]
    %v247 = vld [vmem:[%s237 + $0x48] sm:$0xff]
    %v248 = vld [vmem:[%s237 + $0x50] sm:$0xff]
    %v249 = vld [vmem:[%s237 + $0x58] sm:$0xff]
    %v250 = vld [vmem:[%s237 + $0x60] sm:$0xff]
    %v251 = vld [vmem:[%s237 + $0x68] sm:$0xff]
    %v252 = vld [vmem:[%s237 + $0x70] sm:$0xff]
    %v253 = vld [vmem:[%s237 + $0x78] sm:$0xff]
    %s254 = scalar_lea.vmem %s3, 2
    %v255 = vld [vmem:[%s254] sm:$0x1]
    %v257 = vlaneseq
    %v258 = vshrl.u32 %v257, 7
    %v259 = vsub.s32 0, %v258
    %v260 = vrot.slane %v255, %v259
    %262 = vmatprep.subr.mxu0 0.0
    %263 = vmatpush1.msra.mxu0 %v238
    %264 = vmatprep.subr.mxu0 0.0
    %265 = vmatpush1.msra.mxu0 %v239
    %266 = vmatprep.subr.mxu0 0.0
    %267 = vmatpush1.msra.mxu0 %v240
    %268 = vmatprep.subr.mxu0 0.0
    %269 = vmatpush1.msra.mxu0 %v241
    %270 = vmatprep.subr.mxu0 0.0
    %271 = vmatpush1.msra.mxu0 %v242
    %272 = vmatprep.subr.mxu0 0.0
    %273 = vmatpush1.msra.mxu0 %v243
    %274 = vmatprep.subr.mxu0 0.0
    %275 = vmatpush1.msra.mxu0 %v244
    %276 = vmatprep.subr.mxu0 0.0
    %277 = vmatpush1.msra.mxu0 %v245
    %278 = vmatprep.subr.mxu0 0.0
    %279 = vmatpush1.msra.mxu0 %v246
    %280 = vmatprep.subr.mxu0 0.0
    %281 = vmatpush1.msra.mxu0 %v247
    %282 = vmatprep.subr.mxu0 0.0
    %283 = vmatpush1.msra.mxu0 %v248
    %284 = vmatprep.subr.mxu0 0.0
    %285 = vmatpush1.msra.mxu0 %v249
    %286 = vmatprep.subr.mxu0 0.0
    %287 = vmatpush1.msra.mxu0 %v250
    %288 = vmatprep.subr.mxu0 0.0
    %289 = vmatpush1.msra.mxu0 %v251
    %290 = vmatprep.subr.mxu0 0.0
    %291 = vmatpush1.msra.mxu0 %v252
    %292 = vmatprep.subr.mxu0 0.0
    %293 = vmatpush1.msra.mxu0 %v253
    %294 = vmatprep.subr.mxu0 0.0
    %295 = vmatpush1.msra.mxu0 0.0
    %296 = vmatprep.subr.mxu0 0.0
    %297 = vmatpush1.msra.mxu0 0.0
    %298 = vmatprep.subr.mxu0 0.0
    %299 = vmatpush1.msra.mxu0 0.0
    %300 = vmatprep.subr.mxu0 0.0
    %301 = vmatpush1.msra.mxu0 0.0
    %302 = vmatprep.subr.mxu0 0.0
    %303 = vmatpush1.msra.mxu0 0.0
    %304 = vmatprep.subr.mxu0 0.0
    %305 = vmatpush1.msra.mxu0 0.0
    %306 = vmatprep.subr.mxu0 0.0
    %307 = vmatpush1.msra.mxu0 0.0
    %308 = vmatprep.subr.mxu0 0.0
    %309 = vmatpush1.msra.mxu0 0.0
    %310 = vmatprep.subr.mxu0 0.0
    %311 = vmatpush1.msra.mxu0 0.0
    %312 = vmatprep.subr.mxu0 0.0
    %313 = vmatpush1.msra.mxu0 0.0
    %314 = vmatprep.subr.mxu0 0.0
    %315 = vmatpush1.msra.mxu0 0.0
    %316 = vmatprep.subr.mxu0 0.0
    %317 = vmatpush1.msra.mxu0 0.0
    %318 = vmatprep.subr.mxu0 0.0
    %319 = vmatpush1.msra.mxu0 0.0
    %320 = vmatprep.subr.mxu0 0.0
    %321 = vmatpush1.msra.mxu0 0.0
    %322 = vmatprep.subr.mxu0 0.0
    %323 = vmatpush1.msra.mxu0 0.0
    %324 = vmatprep.subr.mxu0 0.0
    %325 = vmatpush1.msra.mxu0 0.0
    %326 = vmatprep.mubr.f32.mxu0 0.0
    %327 = vmatmul.mubr.f32.gmra.mrb[0].mxu0 %v236
    %v328 = vpop.f32.mrb[0].mxu0
    %v329 = vadd.f32 %v260, %v328
    %v330 = vpop.f32.mrb[0].mxu0
    %331 = vdwg.mxu0
    %v332 = vmul.f32 %v329, 0.01
    %v333 = vmax.f32 %v329, %v332
    %s334 = scalar_lea.vmem [#allocation6], 256
    %v335 = vld [vmem:[%s334] sm:$0xff]
    %v336 = vld [vmem:[%s334 + $0x8] sm:$0xff]
    %v337 = vld [vmem:[%s334 + $0x10] sm:$0xff]
    %v338 = vld [vmem:[%s334 + $0x18] sm:$0xff]
    %v339 = vld [vmem:[%s334 + $0x20] sm:$0xff]
    %v340 = vld [vmem:[%s334 + $0x28] sm:$0xff]
    %v341 = vld [vmem:[%s334 + $0x30] sm:$0xff]
    %v342 = vld [vmem:[%s334 + $0x38] sm:$0xff]
    %v343 = vld [vmem:[%s334 + $0x40] sm:$0xff]
    %v344 = vld [vmem:[%s334 + $0x48] sm:$0xff]
    %v345 = vld [vmem:[%s334 + $0x50] sm:$0xff]
    %v346 = vld [vmem:[%s334 + $0x58] sm:$0xff]
    %v347 = vld [vmem:[%s334 + $0x60] sm:$0xff]
    %v348 = vld [vmem:[%s334 + $0x68] sm:$0xff]
    %v349 = vld [vmem:[%s334 + $0x70] sm:$0xff]
    %v350 = vld [vmem:[%s334 + $0x78] sm:$0xff]
    %s351 = scalar_lea.vmem %s3, 3
    %v352 = vld [vmem:[%s351] sm:$0x1]
    %v354 = vlaneseq
    %v355 = vshrl.u32 %v354, 7
    %v356 = vsub.s32 0, %v355
    %v357 = vrot.slane %v352, %v356
    %359 = vmatprep.subr.mxu0 0.0
    %360 = vmatpush1.msra.mxu0 %v335
    %361 = vmatprep.subr.mxu0 0.0
    %362 = vmatpush1.msra.mxu0 %v336
    %363 = vmatprep.subr.mxu0 0.0
    %364 = vmatpush1.msra.mxu0 %v337
    %365 = vmatprep.subr.mxu0 0.0
    %366 = vmatpush1.msra.mxu0 %v338
    %367 = vmatprep.subr.mxu0 0.0
    %368 = vmatpush1.msra.mxu0 %v339
    %369 = vmatprep.subr.mxu0 0.0
    %370 = vmatpush1.msra.mxu0 %v340
    %371 = vmatprep.subr.mxu0 0.0
    %372 = vmatpush1.msra.mxu0 %v341
    %373 = vmatprep.subr.mxu0 0.0
    %374 = vmatpush1.msra.mxu0 %v342
    %375 = vmatprep.subr.mxu0 0.0
    %376 = vmatpush1.msra.mxu0 %v343
    %377 = vmatprep.subr.mxu0 0.0
    %378 = vmatpush1.msra.mxu0 %v344
    %379 = vmatprep.subr.mxu0 0.0
    %380 = vmatpush1.msra.mxu0 %v345
    %381 = vmatprep.subr.mxu0 0.0
    %382 = vmatpush1.msra.mxu0 %v346
    %383 = vmatprep.subr.mxu0 0.0
    %384 = vmatpush1.msra.mxu0 %v347
    %385 = vmatprep.subr.mxu0 0.0
    %386 = vmatpush1.msra.mxu0 %v348
    %387 = vmatprep.subr.mxu0 0.0
    %388 = vmatpush1.msra.mxu0 %v349
    %389 = vmatprep.subr.mxu0 0.0
    %390 = vmatpush1.msra.mxu0 %v350
    %391 = vmatprep.subr.mxu0 0.0
    %392 = vmatpush1.msra.mxu0 0.0
    %393 = vmatprep.subr.mxu0 0.0
    %394 = vmatpush1.msra.mxu0 0.0
    %395 = vmatprep.subr.mxu0 0.0
    %396 = vmatpush1.msra.mxu0 0.0
    %397 = vmatprep.subr.mxu0 0.0
    %398 = vmatpush1.msra.mxu0 0.0
    %399 = vmatprep.subr.mxu0 0.0
    %400 = vmatpush1.msra.mxu0 0.0
    %401 = vmatprep.subr.mxu0 0.0
    %402 = vmatpush1.msra.mxu0 0.0
    %403 = vmatprep.subr.mxu0 0.0
    %404 = vmatpush1.msra.mxu0 0.0
    %405 = vmatprep.subr.mxu0 0.0
    %406 = vmatpush1.msra.mxu0 0.0
    %407 = vmatprep.subr.mxu0 0.0
    %408 = vmatpush1.msra.mxu0 0.0
    %409 = vmatprep.subr.mxu0 0.0
    %410 = vmatpush1.msra.mxu0 0.0
    %411 = vmatprep.subr.mxu0 0.0
    %412 = vmatpush1.msra.mxu0 0.0
    %413 = vmatprep.subr.mxu0 0.0
    %414 = vmatpush1.msra.mxu0 0.0
    %415 = vmatprep.subr.mxu0 0.0
    %416 = vmatpush1.msra.mxu0 0.0
    %417 = vmatprep.subr.mxu0 0.0
    %418 = vmatpush1.msra.mxu0 0.0
    %419 = vmatprep.subr.mxu0 0.0
    %420 = vmatpush1.msra.mxu0 0.0
    %421 = vmatprep.subr.mxu0 0.0
    %422 = vmatpush1.msra.mxu0 0.0
    %423 = vmatprep.mubr.f32.mxu0 0.0
    %424 = vmatmul.mubr.f32.gmra.mrb[0].mxu0 %v333
    %v425 = vpop.f32.mrb[0].mxu0
    %v426 = vadd.f32 %v357, %v425
    %v427 = vpop.f32.mrb[0].mxu0
    %428 = vdwg.mxu0
    %v429 = vmul.f32 %v426, 0.01
    %v430 = vmax.f32 %v426, %v429
    %s431 = scalar_lea.vmem [#allocation6], 384
    %v432 = vld [vmem:[%s431] sm:$0xff]
    %v433 = vld [vmem:[%s431 + $0x8] sm:$0xff]
    %v434 = vld [vmem:[%s431 + $0x10] sm:$0xff]
    %v435 = vld [vmem:[%s431 + $0x18] sm:$0xff]
    %v436 = vld [vmem:[%s431 + $0x20] sm:$0xff]
    %v437 = vld [vmem:[%s431 + $0x28] sm:$0xff]
    %v438 = vld [vmem:[%s431 + $0x30] sm:$0xff]
    %v439 = vld [vmem:[%s431 + $0x38] sm:$0xff]
    %v440 = vld [vmem:[%s431 + $0x40] sm:$0xff]
    %v441 = vld [vmem:[%s431 + $0x48] sm:$0xff]
    %v442 = vld [vmem:[%s431 + $0x50] sm:$0xff]
    %v443 = vld [vmem:[%s431 + $0x58] sm:$0xff]
    %v444 = vld [vmem:[%s431 + $0x60] sm:$0xff]
    %v445 = vld [vmem:[%s431 + $0x68] sm:$0xff]
    %v446 = vld [vmem:[%s431 + $0x70] sm:$0xff]
    %v447 = vld [vmem:[%s431 + $0x78] sm:$0xff]
    %s448 = scalar_lea.vmem %s3, 4
    %v449 = vld [vmem:[%s448] sm:$0x1]
    %v451 = vlaneseq
    %v452 = vshrl.u32 %v451, 7
    %v453 = vsub.s32 0, %v452
    %v454 = vrot.slane %v449, %v453
    %456 = vmatprep.subr.mxu0 0.0
    %457 = vmatpush1.msra.mxu0 %v432
    %458 = vmatprep.subr.mxu0 0.0
    %459 = vmatpush1.msra.mxu0 %v433
    %460 = vmatprep.subr.mxu0 0.0
    %461 = vmatpush1.msra.mxu0 %v434
    %462 = vmatprep.subr.mxu0 0.0
    %463 = vmatpush1.msra.mxu0 %v435
    %464 = vmatprep.subr.mxu0 0.0
    %465 = vmatpush1.msra.mxu0 %v436
    %466 = vmatprep.subr.mxu0 0.0
    %467 = vmatpush1.msra.mxu0 %v437
    %468 = vmatprep.subr.mxu0 0.0
    %469 = vmatpush1.msra.mxu0 %v438
    %470 = vmatprep.subr.mxu0 0.0
    %471 = vmatpush1.msra.mxu0 %v439
    %472 = vmatprep.subr.mxu0 0.0
    %473 = vmatpush1.msra.mxu0 %v440
    %474 = vmatprep.subr.mxu0 0.0
    %475 = vmatpush1.msra.mxu0 %v441
    %476 = vmatprep.subr.mxu0 0.0
    %477 = vmatpush1.msra.mxu0 %v442
    %478 = vmatprep.subr.mxu0 0.0
    %479 = vmatpush1.msra.mxu0 %v443
    %480 = vmatprep.subr.mxu0 0.0
    %481 = vmatpush1.msra.mxu0 %v444
    %482 = vmatprep.subr.mxu0 0.0
    %483 = vmatpush1.msra.mxu0 %v445
    %484 = vmatprep.subr.mxu0 0.0
    %485 = vmatpush1.msra.mxu0 %v446
    %486 = vmatprep.subr.mxu0 0.0
    %487 = vmatpush1.msra.mxu0 %v447
    %488 = vmatprep.subr.mxu0 0.0
    %489 = vmatpush1.msra.mxu0 0.0
    %490 = vmatprep.subr.mxu0 0.0
    %491 = vmatpush1.msra.mxu0 0.0
    %492 = vmatprep.subr.mxu0 0.0
    %493 = vmatpush1.msra.mxu0 0.0
    %494 = vmatprep.subr.mxu0 0.0
    %495 = vmatpush1.msra.mxu0 0.0
    %496 = vmatprep.subr.mxu0 0.0
    %497 = vmatpush1.msra.mxu0 0.0
    %498 = vmatprep.subr.mxu0 0.0
    %499 = vmatpush1.msra.mxu0 0.0
    %500 = vmatprep.subr.mxu0 0.0
    %501 = vmatpush1.msra.mxu0 0.0
    %502 = vmatprep.subr.mxu0 0.0
    %503 = vmatpush1.msra.mxu0 0.0
    %504 = vmatprep.subr.mxu0 0.0
    %505 = vmatpush1.msra.mxu0 0.0
    %506 = vmatprep.subr.mxu0 0.0
    %507 = vmatpush1.msra.mxu0 0.0
    %508 = vmatprep.subr.mxu0 0.0
    %509 = vmatpush1.msra.mxu0 0.0
    %510 = vmatprep.subr.mxu0 0.0
    %511 = vmatpush1.msra.mxu0 0.0
    %512 = vmatprep.subr.mxu0 0.0
    %513 = vmatpush1.msra.mxu0 0.0
    %514 = vmatprep.subr.mxu0 0.0
    %515 = vmatpush1.msra.mxu0 0.0
    %516 = vmatprep.subr.mxu0 0.0
    %517 = vmatpush1.msra.mxu0 0.0
    %518 = vmatprep.subr.mxu0 0.0
    %519 = vmatpush1.msra.mxu0 0.0
    %520 = vmatprep.mubr.f32.mxu0 0.0
    %521 = vmatmul.mubr.f32.gmra.mrb[0].mxu0 %v430
    %v522 = vpop.f32.mrb[0].mxu0
    %v523 = vadd.f32 %v454, %v522
    %v524 = vpop.f32.mrb[0].mxu0
    %525 = vdwg.mxu0
    %526 = vst [vmem:[#allocation7] sm:$0xff] %v523
    // Predicated region
    $region30: #{forward.1} parent=1 // pred_check
      _
    $region31: #{forward.1} parent=1 // pred_check_branch
      %528 = sbr.rel (0) target = $region33
    $region32: #{forward.1} parent=1 // pred_region
      // Predicated region
      $region34: #{forward.1} parent=32 // pred_check
        _
      $region35: #{forward.1} parent=32 // pred_check_branch
        %530 = sbr.rel (0) target = $region37
      $region36: #{forward.1} parent=32 // pred_region
        // Predicated region
        $region38: #{forward.1} parent=36 // pred_check
          _
        $region39: #{forward.1} parent=36 // pred_check_branch
          %532 = sbr.rel target = $region41
        $region40: #{forward.1} parent=36 // pred_region
          // Predicated region
          $region53: #{forward.1} parent=40 // pred_check
            _
          $region54: #{forward.1} parent=40 // pred_check_branch
            %547 = sbr.rel (0) target = $region56
          $region55: #{forward.1} parent=40 // pred_region
            loop: start=0, step=1, limit=1
            $region57: #{forward.1} parent=55 // loop_pre_header
              _
            $region58: #{forward.1} parent=55 // loop_header
              %s550 = sphi 0, %s554
              %p551 = scmp.ge.s32.totalorder %s550, 1
              %s555 = sphi [#allocation7], [#allocation7]
              %s556 = sphi %s4, %s4
            $region59: #{forward.1} parent=55 // loop_header_branch
              %553 = sbr.rel (%p551) target = $region63
            $region60: #{forward.1} parent=55 // loop_body
              %v557 = vld [vmem:[%s555] sm:$0xf]
              %558 = vst [vmem:[%s556] sm:$0xf] %v557
            $region61: #{forward.1} parent=55 // loop_footer
              %s554 = sadd.s32 1, %s550
            $region62: #{forward.1} parent=55 // loop_footer_branch
              %549 = sbr.rel target = $region58
            $region63: #{forward.1} parent=55 // loop_exit
              _
          $region56: #{forward.1} parent=40 // pred_fallthru
            _
        $region41: #{forward.1} parent=36 // pred_fallthru
          _
        // Predicated region
        $region42: #{forward.1} parent=36 // pred_check
          _
        $region43: #{forward.1} parent=36 // pred_check_branch
          %534 = sbr.rel (0) target = $region45
        $region44: #{forward.1} parent=36 // pred_region
          loop: start=0, step=1, limit=1
          $region46: #{forward.1} parent=44 // loop_pre_header
            _
          $region47: #{forward.1} parent=44 // loop_header
            %s537 = sphi 0, %s541
            %p538 = scmp.ge.s32.totalorder %s537, 1
            %s542 = sphi [#allocation7], [#allocation7]
            %s543 = sphi %s4, %s4
          $region48: #{forward.1} parent=44 // loop_header_branch
            %540 = sbr.rel (%p538) target = $region52
          $region49: #{forward.1} parent=44 // loop_body
            %v544 = vld [vmem:[%s542] sm:$0xf]
            %545 = vst [vmem:[%s543] sm:$0xf] %v544
          $region50: #{forward.1} parent=44 // loop_footer
            %s541 = sadd.s32 1, %s537
          $region51: #{forward.1} parent=44 // loop_footer_branch
            %536 = sbr.rel target = $region47
          $region52: #{forward.1} parent=44 // loop_exit
            _
        $region45: #{forward.1} parent=36 // pred_fallthru
          _
      $region37: #{forward.1} parent=32 // pred_fallthru
        _
      %559 = vnop
    $region33: #{forward.1} parent=1 // pred_fallthru
      _
    // Predicated region
    $region64: #{forward.1} parent=1 // pred_check
      _
    $region65: #{forward.1} parent=1 // pred_check_branch
      %561 = sbr.rel (0) target = $region67
    $region66: #{forward.1} parent=1 // pred_region
      _
    $region67: #{forward.1} parent=1 // pred_fallthru
      _
    %562 = vsyncpa [#allocation3], 1
    %563 = vsyncpa [#allocation5], 1

</llo_original>
